<compile_context>
chip_gen: v7x
topology: tpu7x:2x2x1
jax: 0.10.0
libtpu: 0.0.40
codegen_flags: <defaults>
</compile_context>

<pallas_src>
import functools

import jax
import jax.numpy as jnp
from jax.experimental import pallas as pl
from jax.experimental.pallas import tpu as pltpu

EPS = 1e-5          # nn.BatchNorm2d default eps
LANE = 128          # TPU lane width


def _round_up(x, m):
    return (x + m - 1) // m * m


# ---------------------------------------------------------------------------
# Fused ResBlock kernel (whole problem VMEM-resident, grid-less)
# ---------------------------------------------------------------------------
def _resblock_kernel(x_ref, w1_ref, w2_ref, g1_ref, be1_ref, g2_ref, be2_ref,
                     o_ref, *, n, h, w, pad, stride, ksize,
                     oh1, ow1, cin, hid, conv2_taps):
    """Ref layouts:
         x_ref : (H*W, N, CP)      f32   lane-dense input/residual slab (pad lanes = 0)
         w1_ref: (k*k*Cin, HP)     bf16  conv1 weight, dense 2-D, out lanes padded to 128
         w2_ref: (ntaps*hid, CP)   bf16  conv2 weight, valid taps only,
                                         contraction NOT padded, out lanes padded
         g*/be*: (1, HP)/(1, CP)   f32   BN affine (zero-padded lanes)
         o_ref : (H*W, N, CP)      f32   x + convblock(x), lane-dense
    """
    f32, bf16 = jnp.float32, jnp.bfloat16

    def batchnorm_relu(z, g, be):
        # Training-mode BN folded to a single FMA.  Two-pass stats (mean, then
        # centered variance): numerically robust and free here since z is one
        # VMEM-resident tile.  Conv bias is dropped upstream because the batch
        # mean subtraction cancels it exactly.
        mu = jnp.mean(z, axis=0, keepdims=True)
        var = jnp.mean(jnp.square(z - mu), axis=0, keepdims=True)
        scale = g * jax.lax.rsqrt(var + EPS)          # (1, C)
        shift = be - mu * scale                       # (1, C)
        return jnp.maximum(z * scale + shift, 0.0)

    # ---- conv1 + BN1 + ReLU: in-kernel im2col, ONE MXU matmul --------------
    zero_tap = jnp.zeros((n, cin), f32)
    row_blocks = []
    for oy in range(oh1):
        for ox in range(ow1):
            taps = []
            for kh in range(ksize):
                iy = oy * stride + kh - pad
                for kw in range(ksize):
                    ix = ox * stride + kw - pad
                    if 0 <= iy < h and 0 <= ix < w:
                        taps.append(x_ref[iy * w + ix, :, :cin])   # (N, Cin) f32
                    else:
                        taps.append(zero_tap)                      # padded tap
            row_blocks.append(jnp.concatenate(taps, axis=-1))      # (N, 9*Cin)
    # One hoisted bf16 cast of the assembled patch matrix (f32 acc on the MXU).
    lhs1 = jnp.concatenate(row_blocks, axis=0).astype(bf16)        # (N*OH1*OW1, 9*Cin)
    z1 = jnp.dot(lhs1, w1_ref[...], preferred_element_type=f32)    # (N*OH1*OW1, HP)
    y1 = batchnorm_relu(z1, g1_ref[...], be1_ref[...])             # f32, pad lanes = 0

    # ---- conv2 + BN2 + ReLU: valid taps concatenated along the contraction -
    # Contraction = ntaps*hid (NOT padded to 128), still ONE MXU matmul.
    lhs2 = jnp.concatenate(
        [y1[p * n:(p + 1) * n, :hid] for p in conv2_taps],
        axis=-1).astype(bf16)                                      # (N, ntaps*hid)
    z2 = jnp.dot(lhs2, w2_ref[...], preferred_element_type=f32)    # (N, CP)
    y2 = batchnorm_relu(z2, g2_ref[...], be2_ref[...])             # pad lanes = 0

    # ---- fused residual epilogue: one lane-dense unmasked store ------------
    # out[p, b, c] = x[p, b, c] + y2[b, c]   (conv2 output is 1x1 -> broadcast)
    o_ref[...] = x_ref[...] + y2[None, :, :]


# ---------------------------------------------------------------------------
# Wrapper: layout prep (lane-dense slabs, dense 2-D weights) + pallas_call
# ---------------------------------------------------------------------------
def res_block_forward(x_nchw, params, pad):
    n, cin, h, w = x_nchw.shape
    hid = params["w1"].shape[0]
    cout = params["w2"].shape[0]
    stride, ksize = 2, 3

    oh1 = (h + 2 * pad - ksize) // stride + 1
    ow1 = (w + 2 * pad - ksize) // stride + 1
    oh2 = (oh1 + 2 * pad - ksize) // stride + 1
    ow2 = (ow1 + 2 * pad - ksize) // stride + 1
    # PyTorch broadcast semantics of `x + convblock(x)` with stride-2 convs.
    assert cout == cin and oh2 == 1 and ow2 == 1, "residual not broadcastable"

    hp = _round_up(hid, LANE)     # conv1 output lanes
    cp = _round_up(cout, LANE)    # conv2 output lanes (== residual lane width)

    # Lane-dense input/residual slab: (H*W, N, CP) f32, channel lanes zero-padded.
    x_pos = jnp.transpose(x_nchw, (2, 3, 0, 1)).reshape(h * w, n, cin)
    x_res = jnp.pad(x_pos.astype(jnp.float32), ((0, 0), (0, 0), (0, cp - cin)))

    # conv1 weight: (O, I, kh, kw) -> dense 2-D (kh*kw*I, O), O lane-padded, bf16.
    w1 = jnp.transpose(params["w1"], (2, 3, 1, 0)).reshape(ksize * ksize * cin, hid)
    w1 = jnp.pad(w1, ((0, 0), (0, hp - hid))).astype(jnp.bfloat16)

    # conv2 weight: keep only taps that land inside the (oh1, ow1) conv1 output
    # (single 1x1 output position); contraction = ntaps*hid, lanes padded to CP.
    conv2_taps = []
    w2_blocks = []
    for kh in range(ksize):
        iy = kh - pad                       # oy = 0
        for kw in range(ksize):
            ix = kw - pad                   # ox = 0
            if 0 <= iy < oh1 and 0 <= ix < ow1:
                conv2_taps.append(iy * ow1 + ix)
                w2_blocks.append(params["w2"][:, :, kh, kw].T)      # (hid, cout)
    conv2_taps = tuple(conv2_taps)
    w2 = jnp.concatenate(w2_blocks, axis=0)                          # (ntaps*hid, cout)
    w2 = jnp.pad(w2, ((0, 0), (0, cp - cout))).astype(jnp.bfloat16)

    # BN affine, zero-padded lanes.  Conv biases are intentionally NOT passed:
    # training-mode BatchNorm's mean subtraction cancels them exactly.
    g1 = jnp.pad(params["g1"], (0, hp - hid)).reshape(1, hp).astype(jnp.float32)
    be1 = jnp.pad(params["be1"], (0, hp - hid)).reshape(1, hp).astype(jnp.float32)
    g2 = jnp.pad(params["g2"], (0, cp - cout)).reshape(1, cp).astype(jnp.float32)
    be2 = jnp.pad(params["be2"], (0, cp - cout)).reshape(1, cp).astype(jnp.float32)

    kernel = functools.partial(
        _resblock_kernel, n=n, h=h, w=w, pad=pad, stride=stride, ksize=ksize,
        oh1=oh1, ow1=ow1, cin=cin, hid=hid, conv2_taps=conv2_taps)

    flops = (2 * n * oh1 * ow1 * (ksize * ksize * cin) * hid
             + 2 * n * (len(conv2_taps) * hid) * cout)
    bytes_accessed = (2 * x_res.size * 4 + w1.size * 2 + w2.size * 2
                      + (g1.size + be1.size + g2.size + be2.size) * 4)

    out_pos = pl.pallas_call(
        kernel,
        out_shape=jax.ShapeDtypeStruct((h * w, n, cp), jnp.float32),
        in_specs=[pl.BlockSpec(memory_space=pltpu.MemorySpace.VMEM)] * 7,
        out_specs=pl.BlockSpec(memory_space=pltpu.MemorySpace.VMEM),
        compiler_params=pltpu.CompilerParams(vmem_limit_bytes=32 * 1024 * 1024),
        cost_estimate=pl.CostEstimate(flops=flops,
                                      transcendentals=hid + cout,
                                      bytes_accessed=bytes_accessed),
    )(x_res, w1, w2, g1, be1, g2, be2)

    # (H*W, N, CP) -> drop padded lanes -> (N, C, H, W)
    return jnp.transpose(out_pos[..., :cin].reshape(h, w, n, cin), (2, 3, 0, 1))


# ---------------------------------------------------------------------------
# Pure-JAX reference (PyTorch module, training-mode BN).  With
# mxu_bf16_inputs=True the conv operands are rounded to bf16 (f32 accumulation)
# to mirror the precision the kernel feeds the MXU, so the comparison isolates
# implementation correctness from the deliberate bf16-input choice.
# ---------------------------------------------------------------------------
def _reference(x_nchw, params, pad, *, mxu_bf16_inputs=True):
    def maybe_cast(t):
        return t.astype(jnp.bfloat16) if mxu_bf16_inputs else t

    def convbnrelu(xx, wt, b, g, be):
        z = jax.lax.conv_general_dilated(
            maybe_cast(xx), maybe_cast(wt), window_strides=(2, 2),
            padding=((pad, pad), (pad, pad)),
            dimension_numbers=("NCHW", "OIHW", "NCHW"),
            preferred_element_type=jnp.float32)
        z = z + b[None, :, None, None]
        mu = jnp.mean(z, axis=(0, 2, 3), keepdims=True)
        var = jnp.mean((z - mu) ** 2, axis=(0, 2, 3), keepdims=True)
        z = (z - mu) * jax.lax.rsqrt(var + EPS) * g[None, :, None, None] \
            + be[None, :, None, None]
        return jnp.maximum(z, 0.0)

    y = convbnrelu(x_nchw, params["w1"], params["b1"], params["g1"], params["be1"])
    y = convbnrelu(y, params["w2"], params["b2"], params["g2"], params["be2"])
    return x_nchw + y


if __name__ == "__main__":
    key = jax.random.PRNGKey(0)
    # Residual broadcast requires the two stride-2 convs to collapse spatial to
    # 1x1, hence H = W = 4; batch 8 gives the BN / matmuls a few more rows.
    n, in_size, hidden, out_size, hgt, wid, pad = 8, 4, 8, 4, 4, 4, 1
    k1, k2, k3, k4, k5, k6, k7, k8, k9 = jax.random.split(key, 9)
    params = {
        "w1": 0.1 * jax.random.normal(k1, (hidden, in_size, 3, 3), jnp.float32),
        "b1": 0.1 * jax.random.normal(k2, (hidden,), jnp.float32),
        "g1": 1.0 + 0.1 * jax.random.normal(k6, (hidden,), jnp.float32),
        "be1": 0.1 * jax.random.normal(k7, (hidden,), jnp.float32),
        "w2": 0.1 * jax.random.normal(k3, (out_size, hidden, 3, 3), jnp.float32),
        "b2": 0.1 * jax.random.normal(k4, (out_size,), jnp.float32),
        "g2": 1.0 + 0.1 * jax.random.normal(k8, (out_size,), jnp.float32),
        "be2": 0.1 * jax.random.normal(k9, (out_size,), jnp.float32),
    }
    x = jax.random.normal(k5, (n, in_size, hgt, wid), jnp.float32)

    out = jax.block_until_ready(res_block_forward(x, params, pad))
    ref = jax.block_until_ready(_reference(x, params, pad))
    assert out.shape == x.shape
    err = float(jnp.max(jnp.abs(out - ref)))
    if err > 1e-2:
        raise AssertionError(f"mismatch vs reference: {err}")
    print("KERNEL_OK")
</pallas_src>

<mosaic_0001>
module attributes {stable_mosaic.version = 11 : i64} {
  func.func @_resblock_kernel(%arg0: memref<16x8x128xf32, #tpu.memory_space<vmem>>, %arg1: memref<36x128xbf16, #tpu.memory_space<vmem>>, %arg2: memref<32x128xbf16, #tpu.memory_space<vmem>>, %arg3: memref<1x128xf32, #tpu.memory_space<vmem>>, %arg4: memref<1x128xf32, #tpu.memory_space<vmem>>, %arg5: memref<1x128xf32, #tpu.memory_space<vmem>>, %arg6: memref<1x128xf32, #tpu.memory_space<vmem>>, %arg7: memref<16x8x128xf32, #tpu.memory_space<vmem>>) attributes {dimension_semantics = [], scalar_prefetch = 0 : i64, scratch_operands = 0 : i64, tpu.core_type = #tpu.core_type<tc>} {
    %cst = arith.constant 0.000000e+00 : f32
    %0 = vector.broadcast %cst : f32 to vector<8x4xf32>
    %c0 = arith.constant 0 : index
    %c0_0 = arith.constant 0 : index
    %c0_1 = arith.constant 0 : index
    %1 = vector.load %arg0[%c0, %c0_0, %c0_1] : memref<16x8x128xf32, #tpu.memory_space<vmem>>, vector<1x8x4xf32>
    %2 = vector.shape_cast %1 : vector<1x8x4xf32> to vector<8x4xf32>
    %c1 = arith.constant 1 : index
    %c0_2 = arith.constant 0 : index
    %c0_3 = arith.constant 0 : index
    %3 = vector.load %arg0[%c1, %c0_2, %c0_3] : memref<16x8x128xf32, #tpu.memory_space<vmem>>, vector<1x8x4xf32>
    %4 = vector.shape_cast %3 : vector<1x8x4xf32> to vector<8x4xf32>
    %c4 = arith.constant 4 : index
    %c0_4 = arith.constant 0 : index
    %c0_5 = arith.constant 0 : index
    %5 = vector.load %arg0[%c4, %c0_4, %c0_5] : memref<16x8x128xf32, #tpu.memory_space<vmem>>, vector<1x8x4xf32>
    %6 = vector.shape_cast %5 : vector<1x8x4xf32> to vector<8x4xf32>
    %c5 = arith.constant 5 : index
    %c0_6 = arith.constant 0 : index
    %c0_7 = arith.constant 0 : index
    %7 = vector.load %arg0[%c5, %c0_6, %c0_7] : memref<16x8x128xf32, #tpu.memory_space<vmem>>, vector<1x8x4xf32>
    %8 = vector.shape_cast %7 : vector<1x8x4xf32> to vector<8x4xf32>
    %9 = tpu.concatenate %0, %0, %0, %0, %2, %4, %0, %6, %8 in 1 : vector<8x4xf32>, vector<8x4xf32>, vector<8x4xf32>, vector<8x4xf32>, vector<8x4xf32>, vector<8x4xf32>, vector<8x4xf32>, vector<8x4xf32>, vector<8x4xf32> -> vector<8x36xf32>
    %c1_8 = arith.constant 1 : index
    %c0_9 = arith.constant 0 : index
    %c0_10 = arith.constant 0 : index
    %10 = vector.load %arg0[%c1_8, %c0_9, %c0_10] : memref<16x8x128xf32, #tpu.memory_space<vmem>>, vector<1x8x4xf32>
    %11 = vector.shape_cast %10 : vector<1x8x4xf32> to vector<8x4xf32>
    %c2 = arith.constant 2 : index
    %c0_11 = arith.constant 0 : index
    %c0_12 = arith.constant 0 : index
    %12 = vector.load %arg0[%c2, %c0_11, %c0_12] : memref<16x8x128xf32, #tpu.memory_space<vmem>>, vector<1x8x4xf32>
    %13 = vector.shape_cast %12 : vector<1x8x4xf32> to vector<8x4xf32>
    %c3 = arith.constant 3 : index
    %c0_13 = arith.constant 0 : index
    %c0_14 = arith.constant 0 : index
    %14 = vector.load %arg0[%c3, %c0_13, %c0_14] : memref<16x8x128xf32, #tpu.memory_space<vmem>>, vector<1x8x4xf32>
    %15 = vector.shape_cast %14 : vector<1x8x4xf32> to vector<8x4xf32>
    %c5_15 = arith.constant 5 : index
    %c0_16 = arith.constant 0 : index
    %c0_17 = arith.constant 0 : index
    %16 = vector.load %arg0[%c5_15, %c0_16, %c0_17] : memref<16x8x128xf32, #tpu.memory_space<vmem>>, vector<1x8x4xf32>
    %17 = vector.shape_cast %16 : vector<1x8x4xf32> to vector<8x4xf32>
    %c6 = arith.constant 6 : index
    %c0_18 = arith.constant 0 : index
    %c0_19 = arith.constant 0 : index
    %18 = vector.load %arg0[%c6, %c0_18, %c0_19] : memref<16x8x128xf32, #tpu.memory_space<vmem>>, vector<1x8x4xf32>
    %19 = vector.shape_cast %18 : vector<1x8x4xf32> to vector<8x4xf32>
    %c7 = arith.constant 7 : index
    %c0_20 = arith.constant 0 : index
    %c0_21 = arith.constant 0 : index
    %20 = vector.load %arg0[%c7, %c0_20, %c0_21] : memref<16x8x128xf32, #tpu.memory_space<vmem>>, vector<1x8x4xf32>
    %21 = vector.shape_cast %20 : vector<1x8x4xf32> to vector<8x4xf32>
    %22 = tpu.concatenate %0, %0, %0, %11, %13, %15, %17, %19, %21 in 1 : vector<8x4xf32>, vector<8x4xf32>, vector<8x4xf32>, vector<8x4xf32>, vector<8x4xf32>, vector<8x4xf32>, vector<8x4xf32>, vector<8x4xf32>, vector<8x4xf32> -> vector<8x36xf32>
    %c4_22 = arith.constant 4 : index
    %c0_23 = arith.constant 0 : index
    %c0_24 = arith.constant 0 : index
    %23 = vector.load %arg0[%c4_22, %c0_23, %c0_24] : memref<16x8x128xf32, #tpu.memory_space<vmem>>, vector<1x8x4xf32>
    %24 = vector.shape_cast %23 : vector<1x8x4xf32> to vector<8x4xf32>
    %c5_25 = arith.constant 5 : index
    %c0_26 = arith.constant 0 : index
    %c0_27 = arith.constant 0 : index
    %25 = vector.load %arg0[%c5_25, %c0_26, %c0_27] : memref<16x8x128xf32, #tpu.memory_space<vmem>>, vector<1x8x4xf32>
    %26 = vector.shape_cast %25 : vector<1x8x4xf32> to vector<8x4xf32>
    %c8 = arith.constant 8 : index
    %c0_28 = arith.constant 0 : index
    %c0_29 = arith.constant 0 : index
    %27 = vector.load %arg0[%c8, %c0_28, %c0_29] : memref<16x8x128xf32, #tpu.memory_space<vmem>>, vector<1x8x4xf32>
    %28 = vector.shape_cast %27 : vector<1x8x4xf32> to vector<8x4xf32>
    %c9 = arith.constant 9 : index
    %c0_30 = arith.constant 0 : index
    %c0_31 = arith.constant 0 : index
    %29 = vector.load %arg0[%c9, %c0_30, %c0_31] : memref<16x8x128xf32, #tpu.memory_space<vmem>>, vector<1x8x4xf32>
    %30 = vector.shape_cast %29 : vector<1x8x4xf32> to vector<8x4xf32>
    %c12 = arith.constant 12 : index
    %c0_32 = arith.constant 0 : index
    %c0_33 = arith.constant 0 : index
    %31 = vector.load %arg0[%c12, %c0_32, %c0_33] : memref<16x8x128xf32, #tpu.memory_space<vmem>>, vector<1x8x4xf32>
    %32 = vector.shape_cast %31 : vector<1x8x4xf32> to vector<8x4xf32>
    %c13 = arith.constant 13 : index
    %c0_34 = arith.constant 0 : index
    %c0_35 = arith.constant 0 : index
    %33 = vector.load %arg0[%c13, %c0_34, %c0_35] : memref<16x8x128xf32, #tpu.memory_space<vmem>>, vector<1x8x4xf32>
    %34 = vector.shape_cast %33 : vector<1x8x4xf32> to vector<8x4xf32>
    %35 = tpu.concatenate %0, %24, %26, %0, %28, %30, %0, %32, %34 in 1 : vector<8x4xf32>, vector<8x4xf32>, vector<8x4xf32>, vector<8x4xf32>, vector<8x4xf32>, vector<8x4xf32>, vector<8x4xf32>, vector<8x4xf32>, vector<8x4xf32> -> vector<8x36xf32>
    %c5_36 = arith.constant 5 : index
    %c0_37 = arith.constant 0 : index
    %c0_38 = arith.constant 0 : index
    %36 = vector.load %arg0[%c5_36, %c0_37, %c0_38] : memref<16x8x128xf32, #tpu.memory_space<vmem>>, vector<1x8x4xf32>
    %37 = vector.shape_cast %36 : vector<1x8x4xf32> to vector<8x4xf32>
    %c6_39 = arith.constant 6 : index
    %c0_40 = arith.constant 0 : index
    %c0_41 = arith.constant 0 : index
    %38 = vector.load %arg0[%c6_39, %c0_40, %c0_41] : memref<16x8x128xf32, #tpu.memory_space<vmem>>, vector<1x8x4xf32>
    %39 = vector.shape_cast %38 : vector<1x8x4xf32> to vector<8x4xf32>
    %c7_42 = arith.constant 7 : index
    %c0_43 = arith.constant 0 : index
    %c0_44 = arith.constant 0 : index
    %40 = vector.load %arg0[%c7_42, %c0_43, %c0_44] : memref<16x8x128xf32, #tpu.memory_space<vmem>>, vector<1x8x4xf32>
    %41 = vector.shape_cast %40 : vector<1x8x4xf32> to vector<8x4xf32>
    %c9_45 = arith.constant 9 : index
    %c0_46 = arith.constant 0 : index
    %c0_47 = arith.constant 0 : index
    %42 = vector.load %arg0[%c9_45, %c0_46, %c0_47] : memref<16x8x128xf32, #tpu.memory_space<vmem>>, vector<1x8x4xf32>
    %43 = vector.shape_cast %42 : vector<1x8x4xf32> to vector<8x4xf32>
    %c10 = arith.constant 10 : index
    %c0_48 = arith.constant 0 : index
    %c0_49 = arith.constant 0 : index
    %44 = vector.load %arg0[%c10, %c0_48, %c0_49] : memref<16x8x128xf32, #tpu.memory_space<vmem>>, vector<1x8x4xf32>
    %45 = vector.shape_cast %44 : vector<1x8x4xf32> to vector<8x4xf32>
    %c11 = arith.constant 11 : index
    %c0_50 = arith.constant 0 : index
    %c0_51 = arith.constant 0 : index
    %46 = vector.load %arg0[%c11, %c0_50, %c0_51] : memref<16x8x128xf32, #tpu.memory_space<vmem>>, vector<1x8x4xf32>
    %47 = vector.shape_cast %46 : vector<1x8x4xf32> to vector<8x4xf32>
    %c13_52 = arith.constant 13 : index
    %c0_53 = arith.constant 0 : index
    %c0_54 = arith.constant 0 : index
    %48 = vector.load %arg0[%c13_52, %c0_53, %c0_54] : memref<16x8x128xf32, #tpu.memory_space<vmem>>, vector<1x8x4xf32>
    %49 = vector.shape_cast %48 : vector<1x8x4xf32> to vector<8x4xf32>
    %c14 = arith.constant 14 : index
    %c0_55 = arith.constant 0 : index
    %c0_56 = arith.constant 0 : index
    %50 = vector.load %arg0[%c14, %c0_55, %c0_56] : memref<16x8x128xf32, #tpu.memory_space<vmem>>, vector<1x8x4xf32>
    %51 = vector.shape_cast %50 : vector<1x8x4xf32> to vector<8x4xf32>
    %c15 = arith.constant 15 : index
    %c0_57 = arith.constant 0 : index
    %c0_58 = arith.constant 0 : index
    %52 = vector.load %arg0[%c15, %c0_57, %c0_58] : memref<16x8x128xf32, #tpu.memory_space<vmem>>, vector<1x8x4xf32>
    %53 = vector.shape_cast %52 : vector<1x8x4xf32> to vector<8x4xf32>
    %54 = tpu.concatenate %37, %39, %41, %43, %45, %47, %49, %51, %53 in 1 : vector<8x4xf32>, vector<8x4xf32>, vector<8x4xf32>, vector<8x4xf32>, vector<8x4xf32>, vector<8x4xf32>, vector<8x4xf32>, vector<8x4xf32>, vector<8x4xf32> -> vector<8x36xf32>
    %55 = tpu.concatenate %9, %22, %35, %54 in 0 : vector<8x36xf32>, vector<8x36xf32>, vector<8x36xf32>, vector<8x36xf32> -> vector<32x36xf32>
    %56 = arith.truncf %55 : vector<32x36xf32> to vector<32x36xbf16>
    %c0_59 = arith.constant 0 : index
    %c0_60 = arith.constant 0 : index
    %57 = vector.load %arg1[%c0_59, %c0_60] : memref<36x128xbf16, #tpu.memory_space<vmem>>, vector<36x128xbf16>
    %cst_61 = arith.constant dense<0.000000e+00> : vector<32x128xf32>
    %58 = tpu.matmul %56, %57, %cst_61 {dimension_numbers = #tpu.dot_dimension_numbers<[1], [0], [0], [1], [0, 0, 1, 1], [], []>} : vector<32x36xbf16>, vector<36x128xbf16>, vector<32x128xf32> -> vector<32x128xf32>
    %c0_62 = arith.constant 0 : index
    %c0_63 = arith.constant 0 : index
    %59 = vector.load %arg3[%c0_62, %c0_63] : memref<1x128xf32, #tpu.memory_space<vmem>>, vector<1x128xf32>
    %c0_64 = arith.constant 0 : index
    %c0_65 = arith.constant 0 : index
    %60 = vector.load %arg4[%c0_64, %c0_65] : memref<1x128xf32, #tpu.memory_space<vmem>>, vector<1x128xf32>
    %cst_66 = arith.constant dense<0.000000e+00> : vector<128xf32>
    %61 = vector.multi_reduction <add>, %58, %cst_66 [0] : vector<32x128xf32> to vector<128xf32>
    %62 = vector.shape_cast %61 : vector<128xf32> to vector<1x128xf32>
    %cst_67 = arith.constant 3.200000e+01 : f32
    %63 = vector.broadcast %cst_67 : f32 to vector<1x128xf32>
    %64 = arith.divf %62, %63 : vector<1x128xf32>
    %65 = vector.broadcast %64 : vector<1x128xf32> to vector<32x128xf32>
    %66 = arith.subf %58, %65 : vector<32x128xf32>
    %67 = arith.mulf %66, %66 : vector<32x128xf32>
    %cst_68 = arith.constant dense<0.000000e+00> : vector<128xf32>
    %68 = vector.multi_reduction <add>, %67, %cst_68 [0] : vector<32x128xf32> to vector<128xf32>
    %69 = vector.shape_cast %68 : vector<128xf32> to vector<1x128xf32>
    %cst_69 = arith.constant 3.200000e+01 : f32
    %70 = vector.broadcast %cst_69 : f32 to vector<1x128xf32>
    %71 = arith.divf %69, %70 : vector<1x128xf32>
    %cst_70 = arith.constant 9.99999974E-6 : f32
    %72 = vector.broadcast %cst_70 : f32 to vector<1x128xf32>
    %73 = arith.addf %71, %72 : vector<1x128xf32>
    %74 = math.rsqrt %73 : vector<1x128xf32>
    %75 = arith.mulf %59, %74 : vector<1x128xf32>
    %76 = arith.mulf %64, %75 : vector<1x128xf32>
    %77 = arith.subf %60, %76 : vector<1x128xf32>
    %78 = vector.broadcast %75 : vector<1x128xf32> to vector<32x128xf32>
    %79 = arith.mulf %58, %78 : vector<32x128xf32>
    %80 = vector.broadcast %77 : vector<1x128xf32> to vector<32x128xf32>
    %81 = arith.addf %79, %80 : vector<32x128xf32>
    %cst_71 = arith.constant 0.000000e+00 : f32
    %82 = vector.broadcast %cst_71 : f32 to vector<32x128xf32>
    %83 = arith.maximumf %81, %82 : vector<32x128xf32>
    %84 = vector.extract_strided_slice %83 {offsets = [0, 0], sizes = [8, 8], strides = [1, 1]} : vector<32x128xf32> to vector<8x8xf32>
    %85 = vector.extract_strided_slice %83 {offsets = [8, 0], sizes = [8, 8], strides = [1, 1]} : vector<32x128xf32> to vector<8x8xf32>
    %86 = vector.extract_strided_slice %83 {offsets = [16, 0], sizes = [8, 8], strides = [1, 1]} : vector<32x128xf32> to vector<8x8xf32>
    %87 = vector.extract_strided_slice %83 {offsets = [24, 0], sizes = [8, 8], strides = [1, 1]} : vector<32x128xf32> to vector<8x8xf32>
    %88 = tpu.concatenate %84, %85, %86, %87 in 1 : vector<8x8xf32>, vector<8x8xf32>, vector<8x8xf32>, vector<8x8xf32> -> vector<8x32xf32>
    %89 = arith.truncf %88 : vector<8x32xf32> to vector<8x32xbf16>
    %c0_72 = arith.constant 0 : index
    %c0_73 = arith.constant 0 : index
    %90 = vector.load %arg2[%c0_72, %c0_73] : memref<32x128xbf16, #tpu.memory_space<vmem>>, vector<32x128xbf16>
    %cst_74 = arith.constant dense<0.000000e+00> : vector<8x128xf32>
    %91 = tpu.matmul %89, %90, %cst_74 {dimension_numbers = #tpu.dot_dimension_numbers<[1], [0], [0], [1], [0, 0, 1, 1], [], []>} : vector<8x32xbf16>, vector<32x128xbf16>, vector<8x128xf32> -> vector<8x128xf32>
    %c0_75 = arith.constant 0 : index
    %c0_76 = arith.constant 0 : index
    %92 = vector.load %arg5[%c0_75, %c0_76] : memref<1x128xf32, #tpu.memory_space<vmem>>, vector<1x128xf32>
    %c0_77 = arith.constant 0 : index
    %c0_78 = arith.constant 0 : index
    %93 = vector.load %arg6[%c0_77, %c0_78] : memref<1x128xf32, #tpu.memory_space<vmem>>, vector<1x128xf32>
    %cst_79 = arith.constant dense<0.000000e+00> : vector<128xf32>
    %94 = vector.multi_reduction <add>, %91, %cst_79 [0] : vector<8x128xf32> to vector<128xf32>
    %95 = vector.shape_cast %94 : vector<128xf32> to vector<1x128xf32>
    %cst_80 = arith.constant 8.000000e+00 : f32
    %96 = vector.broadcast %cst_80 : f32 to vector<1x128xf32>
    %97 = arith.divf %95, %96 : vector<1x128xf32>
    %98 = vector.broadcast %97 : vector<1x128xf32> to vector<8x128xf32>
    %99 = arith.subf %91, %98 : vector<8x128xf32>
    %100 = arith.mulf %99, %99 : vector<8x128xf32>
    %cst_81 = arith.constant dense<0.000000e+00> : vector<128xf32>
    %101 = vector.multi_reduction <add>, %100, %cst_81 [0] : vector<8x128xf32> to vector<128xf32>
    %102 = vector.shape_cast %101 : vector<128xf32> to vector<1x128xf32>
    %cst_82 = arith.constant 8.000000e+00 : f32
    %103 = vector.broadcast %cst_82 : f32 to vector<1x128xf32>
    %104 = arith.divf %102, %103 : vector<1x128xf32>
    %cst_83 = arith.constant 9.99999974E-6 : f32
    %105 = vector.broadcast %cst_83 : f32 to vector<1x128xf32>
    %106 = arith.addf %104, %105 : vector<1x128xf32>
    %107 = math.rsqrt %106 : vector<1x128xf32>
    %108 = arith.mulf %92, %107 : vector<1x128xf32>
    %109 = arith.mulf %97, %108 : vector<1x128xf32>
    %110 = arith.subf %93, %109 : vector<1x128xf32>
    %111 = vector.broadcast %108 : vector<1x128xf32> to vector<8x128xf32>
    %112 = arith.mulf %91, %111 : vector<8x128xf32>
    %113 = vector.broadcast %110 : vector<1x128xf32> to vector<8x128xf32>
    %114 = arith.addf %112, %113 : vector<8x128xf32>
    %cst_84 = arith.constant 0.000000e+00 : f32
    %115 = vector.broadcast %cst_84 : f32 to vector<8x128xf32>
    %116 = arith.maximumf %114, %115 : vector<8x128xf32>
    %c0_85 = arith.constant 0 : index
    %c0_86 = arith.constant 0 : index
    %c0_87 = arith.constant 0 : index
    %117 = vector.load %arg0[%c0_85, %c0_86, %c0_87] : memref<16x8x128xf32, #tpu.memory_space<vmem>>, vector<16x8x128xf32>
    %118 = vector.shape_cast %116 : vector<8x128xf32> to vector<1x8x128xf32>
    %119 = vector.broadcast %118 : vector<1x8x128xf32> to vector<16x8x128xf32>
    %120 = arith.addf %117, %119 : vector<16x8x128xf32>
    %c0_88 = arith.constant 0 : index
    %c0_89 = arith.constant 0 : index
    %c0_90 = arith.constant 0 : index
    %121 = vector.load %arg7[%c0_88, %c0_89, %c0_90] : memref<16x8x128xf32, #tpu.memory_space<vmem>>, vector<16x8x128xf32>
    tpu.vector_store %arg7[%c0_88, %c0_89, %c0_90], %120 {strides = array<i32>} : memref<16x8x128xf32, #tpu.memory_space<vmem>>, vector<16x8x128xf32>,
    return
  }
}

</mosaic_0001>

<llo_original>
// kernel: tpu_custom_call.1
$region0: #{tpu_custom_call.1}
  #allocation0 [shape = 'u32[]', space=smem, size = 0x4, offset = 0x4, fixed_abs, tag = 'smem constant byte address 0x4 - core index']
  #allocation1 [shape = 'u32[144,128]{1,0:T(1,128)}', space=vmem, size = 0x12000, scoped, tag = 'internal scratch']
  %s0 = inlined_call_operand.hbm [shape: f32[16,8,128], index: 0, kind: input, shape index: {}]
  %s1 = inlined_call_operand.hbm [shape: bf16[36,128], index: 1, kind: input, shape index: {}]
  %s2 = inlined_call_operand.hbm [shape: bf16[32,128], index: 2, kind: input, shape index: {}]
  %s3 = inlined_call_operand.vmem [shape: f32[1,128], index: 3, kind: input, shape index: {}]
  %s4 = inlined_call_operand.vmem [shape: f32[1,128], index: 4, kind: input, shape index: {}]
  %s5 = inlined_call_operand.vmem [shape: f32[1,128], index: 5, kind: input, shape index: {}]
  %s6 = inlined_call_operand.vmem [shape: f32[1,128], index: 6, kind: input, shape index: {}]
  %s7 = inlined_call_operand.hbm [shape: f32[16,8,128], index: 7, kind: output, shape index: {}]
  %s8 = sld [smem:[#allocation0]]
  $region50: #{tpu_custom_call.1} parent=0
    _
  %s10 = ssub.s32 1, %s8
  %s11 = scalar_select 0, %s10, %s8
  $region1: #{tpu_custom_call.1} parent=0
    #allocation2 [shape = 'u8[65536]{0}', space=vmem, size = 0x10000, scoped, tag = 'input window, operand 0, single buffered']
    #allocation3 [shape = 's32[1]{0}', space=sflag, size = 0x4, scoped, tag = 'scoped memory for tpu_custom_call.1']
    #allocation4 [shape = 's32[1]{0}', space=sflag, size = 0x4, scoped, tag = 'scoped memory for tpu_custom_call.1']
    #allocation5 [shape = 'u8[10240]{0}', space=vmem, size = 0x2800, scoped, tag = 'input window, operand 1, single buffered']
    #allocation6 [shape = 's32[1]{0}', space=sflag, size = 0x4, scoped, tag = 'scoped memory for tpu_custom_call.1']
    #allocation7 [shape = 'u8[8192]{0}', space=vmem, size = 0x2000, scoped, tag = 'input window, operand 2, single buffered']
    #allocation8 [shape = 'u8[65536]{0}', space=vmem, size = 0x10000, scoped, tag = 'output window, operand 0, single buffered']
    %12 = vsyncpa [#allocation3], 0
    %13 = vsyncpa [#allocation6], 0
    %14 = vsyncpa [#allocation4], 0
    // Predicated region
    $region2: #{tpu_custom_call.1} parent=1 // pred_check
      _
    $region3: #{tpu_custom_call.1} parent=1 // pred_check_branch
      %16 = sbr.rel (0) target = $region5
    $region4: #{tpu_custom_call.1} parent=1 // pred_region
      %s18 = ssub.s32 2048, 2048
      %19 = vsyncadd [#allocation3], %s18
      %s20 = sshll.u32 [#allocation2], 4
      %s21 = int_to_ptr.vmem [resolvable:$true] %s20
      %26 = dma.hbm_to_vmem [thread:$0]  %s0, 2048, %s21, [#allocation3], 128, 128, 8
    $region5: #{tpu_custom_call.1} parent=1 // pred_fallthru
      _
    // Predicated region
    $region6: #{tpu_custom_call.1} parent=1 // pred_check
      _
    $region7: #{tpu_custom_call.1} parent=1 // pred_check_branch
      %28 = sbr.rel (0) target = $region9
    $region8: #{tpu_custom_call.1} parent=1 // pred_region
      %s30 = ssub.s32 320, 320
      %31 = vsyncadd [#allocation6], %s30
      %s32 = sshll.u32 [#allocation5], 4
      %s33 = int_to_ptr.vmem [resolvable:$true] %s32
      %38 = dma.hbm_to_vmem [thread:$0]  %s1, 320, %s33, [#allocation6], 64, 64, 4
    $region9: #{tpu_custom_call.1} parent=1 // pred_fallthru
      _
    // Predicated region
    $region10: #{tpu_custom_call.1} parent=1 // pred_check
      _
    $region11: #{tpu_custom_call.1} parent=1 // pred_check_branch
      %40 = sbr.rel (0) target = $region13
    $region12: #{tpu_custom_call.1} parent=1 // pred_region
      %s42 = ssub.s32 256, 256
      %43 = vsyncadd [#allocation6], %s42
      %s44 = sshll.u32 [#allocation7], 4
      %s45 = int_to_ptr.vmem [resolvable:$true] %s44
      %50 = dma.hbm_to_vmem [thread:$0]  %s2, 256, %s45, [#allocation6], 64, 64, 4
    $region13: #{tpu_custom_call.1} parent=1 // pred_fallthru
      _
    // Predicated region
    $region14: #{tpu_custom_call.1} parent=1 // pred_check
      _
    $region15: #{tpu_custom_call.1} parent=1 // pred_check_branch
      %52 = sbr.rel (0) target = $region17
    $region16: #{tpu_custom_call.1} parent=1 // pred_region
      _
    $region17: #{tpu_custom_call.1} parent=1 // pred_fallthru
      _
    // Predicated region
    $region18: #{tpu_custom_call.1} parent=1 // pred_check
      _
    $region19: #{tpu_custom_call.1} parent=1 // pred_check_branch
      %54 = sbr.rel (0) target = $region21
    $region20: #{tpu_custom_call.1} parent=1 // pred_region
      _
    $region21: #{tpu_custom_call.1} parent=1 // pred_fallthru
      _
    // Predicated region
    $region22: #{tpu_custom_call.1} parent=1 // pred_check
      _
    $region23: #{tpu_custom_call.1} parent=1 // pred_check_branch
      %56 = sbr.rel (0) target = $region25
    $region24: #{tpu_custom_call.1} parent=1 // pred_region
      _
    $region25: #{tpu_custom_call.1} parent=1 // pred_fallthru
      _
    // Predicated region
    $region26: #{tpu_custom_call.1} parent=1 // pred_check
      _
    $region27: #{tpu_custom_call.1} parent=1 // pred_check_branch
      %58 = sbr.rel (0) target = $region29
    $region28: #{tpu_custom_call.1} parent=1 // pred_region
      _
    $region29: #{tpu_custom_call.1} parent=1 // pred_fallthru
      _
    // Predicated region
    $region30: #{tpu_custom_call.1} parent=1 // pred_check
      _
    $region31: #{tpu_custom_call.1} parent=1 // pred_check_branch
      %60 = sbr.rel (0) target = $region33
    $region32: #{tpu_custom_call.1} parent=1 // pred_region
      %61 = dma.done [#allocation3], 2048
    $region33: #{tpu_custom_call.1} parent=1 // pred_fallthru
      _
    // Predicated region
    $region34: #{tpu_custom_call.1} parent=1 // pred_check
      _
    $region35: #{tpu_custom_call.1} parent=1 // pred_check_branch
      %63 = sbr.rel (0) target = $region37
    $region36: #{tpu_custom_call.1} parent=1 // pred_region
      %64 = dma.done [#allocation6], 320
    $region37: #{tpu_custom_call.1} parent=1 // pred_fallthru
      _
    // Predicated region
    $region38: #{tpu_custom_call.1} parent=1 // pred_check
      _
    $region39: #{tpu_custom_call.1} parent=1 // pred_check_branch
      %66 = sbr.rel (0) target = $region41
    $region40: #{tpu_custom_call.1} parent=1 // pred_region
      %67 = dma.done [#allocation6], 256
    $region41: #{tpu_custom_call.1} parent=1 // pred_fallthru
      _
    %v69 = vld [vmem:[#allocation2] sm:$0xff]
    %s70 = scalar_lea.vmem [#allocation2], 8
    %v71 = vld [vmem:[%s70] sm:$0xff]
    %s72 = scalar_lea.vmem [#allocation2], 32
    %v73 = vld [vmem:[%s72] sm:$0xff]
    %s74 = scalar_lea.vmem [#allocation2], 40
    %v75 = vld [vmem:[%s74] sm:$0xff]
    %77 = vrot.lane.b32.xlu0 %v69, 16
    %v78 = vpop.permute.xlu0 %77
    %81 = vrot.lane.b32.xlu0 %v71, 20
    %v82 = vpop.permute.xlu0 %81
    %85 = vrot.lane.b32.xlu0 %v73, 28
    %v86 = vpop.permute.xlu0 %85
    %89 = vrot.lane.b32.xlu0 %v75, 32
    %v90 = vpop.permute.xlu0 %89
    %vm92 = vcmask 130048
    %v93 = vsel %vm92, 0.0, %v78
    %vm94 = vcmask 162816
    %v95 = vsel %vm94, %v93, %v82
    %vm96 = vcmask 195584
    %v97 = vsel %vm96, %v95, 0.0
    %vm98 = vcmask 228352
    %v99 = vsel %vm98, %v97, %v86
    %vm100 = vcmask 261120
    %v101 = vsel %vm100, %v99, %v90
    %s102 = scalar_lea.vmem [#allocation2], 16
    %v103 = vld [vmem:[%s102] sm:$0xff]
    %s104 = scalar_lea.vmem [#allocation2], 24
    %v105 = vld [vmem:[%s104] sm:$0xff]
    %s106 = scalar_lea.vmem [#allocation2], 48
    %v107 = vld [vmem:[%s106] sm:$0xff]
    %s108 = scalar_lea.vmem [#allocation2], 56
    %v109 = vld [vmem:[%s108] sm:$0xff]
    %110 = vrot.lane.b32.xlu0 %v71, 12
    %v111 = vpop.permute.xlu0 %110
    %114 = vrot.lane.b32.xlu0 %v103, 16
    %v115 = vpop.permute.xlu0 %114
    %118 = vrot.lane.b32.xlu0 %v105, 20
    %v119 = vpop.permute.xlu0 %118
    %121 = vrot.lane.b32.xlu0 %v75, 24
    %v122 = vpop.permute.xlu0 %121
    %125 = vrot.lane.b32.xlu0 %v107, 28
    %v126 = vpop.permute.xlu0 %125
    %129 = vrot.lane.b32.xlu0 %v109, 32
    %v130 = vpop.permute.xlu0 %129
    %vm132 = vcmask 97280
    %v133 = vsel %vm132, 0.0, %v111
    %v134 = vsel %vm92, %v133, %v115
    %v135 = vsel %vm94, %v134, %v119
    %v136 = vsel %vm96, %v135, %v122
    %v137 = vsel %vm98, %v136, %v126
    %v138 = vsel %vm100, %v137, %v130
    %s139 = scalar_lea.vmem [#allocation2], 64
    %v140 = vld [vmem:[%s139] sm:$0xff]
    %s141 = scalar_lea.vmem [#allocation2], 72
    %v142 = vld [vmem:[%s141] sm:$0xff]
    %s143 = scalar_lea.vmem [#allocation2], 96
    %v144 = vld [vmem:[%s143] sm:$0xff]
    %s145 = scalar_lea.vmem [#allocation2], 104
    %v146 = vld [vmem:[%s145] sm:$0xff]
    %147 = vrot.lane.b32.xlu0 %v73, 4
    %v148 = vpop.permute.xlu0 %147
    %150 = vrot.lane.b32.xlu0 %v75, 8
    %v151 = vpop.permute.xlu0 %150
    %154 = vrot.lane.b32.xlu0 %v140, 16
    %v155 = vpop.permute.xlu0 %154
    %158 = vrot.lane.b32.xlu0 %v142, 20
    %v159 = vpop.permute.xlu0 %158
    %162 = vrot.lane.b32.xlu0 %v144, 28
    %v163 = vpop.permute.xlu0 %162
    %166 = vrot.lane.b32.xlu0 %v146, 32
    %v167 = vpop.permute.xlu0 %166
    %vm169 = vcmask 31744
    %v170 = vsel %vm169, 0.0, %v148
    %vm171 = vcmask 64512
    %v172 = vsel %vm171, %v170, %v151
    %v173 = vsel %vm132, %v172, 0.0
    %v174 = vsel %vm92, %v173, %v155
    %v175 = vsel %vm94, %v174, %v159
    %v176 = vsel %vm96, %v175, 0.0
    %v177 = vsel %vm98, %v176, %v163
    %v178 = vsel %vm100, %v177, %v167
    %s179 = scalar_lea.vmem [#allocation2], 80
    %v180 = vld [vmem:[%s179] sm:$0xff]
    %s181 = scalar_lea.vmem [#allocation2], 88
    %v182 = vld [vmem:[%s181] sm:$0xff]
    %s183 = scalar_lea.vmem [#allocation2], 112
    %v184 = vld [vmem:[%s183] sm:$0xff]
    %s185 = scalar_lea.vmem [#allocation2], 120
    %v186 = vld [vmem:[%s185] sm:$0xff]
    %187 = vrot.lane.b32.xlu0 %v107, 4
    %v188 = vpop.permute.xlu0 %187
    %190 = vrot.lane.b32.xlu0 %v109, 8
    %v191 = vpop.permute.xlu0 %190
    %193 = vrot.lane.b32.xlu0 %v142, 12
    %v194 = vpop.permute.xlu0 %193
    %197 = vrot.lane.b32.xlu0 %v180, 16
    %v198 = vpop.permute.xlu0 %197
    %201 = vrot.lane.b32.xlu0 %v182, 20
    %v202 = vpop.permute.xlu0 %201
    %204 = vrot.lane.b32.xlu0 %v146, 24
    %v205 = vpop.permute.xlu0 %204
    %208 = vrot.lane.b32.xlu0 %v184, 28
    %v209 = vpop.permute.xlu0 %208
    %212 = vrot.lane.b32.xlu0 %v186, 32
    %v213 = vpop.permute.xlu0 %212
    %v215 = vsel %vm169, %v75, %v188
    %v216 = vsel %vm171, %v215, %v191
    %v217 = vsel %vm132, %v216, %v194
    %v218 = vsel %vm92, %v217, %v198
    %v219 = vsel %vm94, %v218, %v202
    %v220 = vsel %vm96, %v219, %v205
    %v221 = vsel %vm98, %v220, %v209
    %v222 = vsel %vm100, %v221, %v213
    %v223 = vpack.c.bf16 %v138, %v101
    %v224 = vpack.c.bf16 %v222, %v178
    %v225 = vld [vmem:[#allocation5] sm:$0xf]
    %v226 = vld [vmem:[#allocation5 + $0x4] sm:$0xf]
    %v227 = vld [vmem:[#allocation5 + $0x8] sm:$0xf]
    %v228 = vld [vmem:[#allocation5 + $0xc] sm:$0xf]
    %v229 = vld [vmem:[#allocation5 + $0x10] sm:$0x3]
    %v235 = vunpack.c.l.b16 %v225
    %v236 = vunpack.c.l.b16 %v226
    %v237 = vunpack.c.l.b16 %v227
    %v238 = vunpack.c.l.b16 %v228
    %v239 = vunpack.c.l.b16 %v229
    %v240 = vpack.c.b16 %v236, %v235
    %v241 = vpack.c.b16 %v238, %v237
    %v242 = vpack.c.b16 %v239, %v239
    %vm245 = vcmask 293888
    %v247 = vsel %vm245, %v223, 0
    %v250 = vsel %vm245, %v224, 0
    %vm252 = vcmask 1041408
    %v254 = vsel %vm252, %v242, 0
    %256 = vmatprep.subr.bf16.mxu0 0
    %257 = vmatpush1.bf16.msra.mxu0 %v240
    %258 = vmatprep.subr.bf16.mxu0 0
    %259 = vmatpush1.bf16.msra.mxu0 %v241
    %260 = vmatprep.subr.bf16.mxu0 0
    %261 = vmatpush1.bf16.msra.mxu0 %v254
    %262 = vmatprep.subr.bf16.mxu0 0
    %263 = vmatpush1.bf16.msra.mxu0 0
    %264 = vmatprep.subr.bf16.mxu0 0
    %265 = vmatpush1.bf16.msra.mxu0 0
    %266 = vmatprep.subr.bf16.mxu0 0
    %267 = vmatpush1.bf16.msra.mxu0 0
    %268 = vmatprep.subr.bf16.mxu0 0
    %269 = vmatpush1.bf16.msra.mxu0 0
    %270 = vmatprep.subr.bf16.mxu0 0
    %271 = vmatpush1.bf16.msra.mxu0 0
    %272 = vmatprep.subr.bf16.mxu0 0
    %273 = vmatpush1.bf16.msra.mxu0 0
    %274 = vmatprep.subr.bf16.mxu0 0
    %275 = vmatpush1.bf16.msra.mxu0 0
    %276 = vmatprep.subr.bf16.mxu0 0
    %277 = vmatpush1.bf16.msra.mxu0 0
    %278 = vmatprep.subr.bf16.mxu0 0
    %279 = vmatpush1.bf16.msra.mxu0 0
    %280 = vmatprep.subr.bf16.mxu0 0
    %281 = vmatpush1.bf16.msra.mxu0 0
    %282 = vmatprep.subr.bf16.mxu0 0
    %283 = vmatpush1.bf16.msra.mxu0 0
    %284 = vmatprep.subr.bf16.mxu0 0
    %285 = vmatpush1.bf16.msra.mxu0 0
    %286 = vmatprep.subr.bf16.mxu0 0
    %287 = vmatpush1.bf16.msra.mxu0 0
    %288 = vmatprep.mubr.bf16.mxu0 0
    %289 = vmatmul.mubr.bf16.gmra.mrb[0].mxu0 %v247
    %v290 = vpop.f32.mrb[0].mxu0
    %v291 = vadd.f32 0.0, %v290
    %v292 = vpop.f32.mrb[0].mxu0
    %v293 = vpop.f32.mrb[0].mxu0
    %v294 = vadd.f32 0.0, %v293
    %v295 = vpop.f32.mrb[0].mxu0
    %296 = vmatprep.mubr.bf16.mxu0 0
    %297 = vmatmul.mubr.bf16.gmra.mrb[0].mxu0 %v250
    %v298 = vpop.f32.mrb[0].mxu0
    %v299 = vadd.f32 0.0, %v298
    %v300 = vpop.f32.mrb[0].mxu0
    %v301 = vpop.f32.mrb[0].mxu0
    %v302 = vadd.f32 0.0, %v301
    %v303 = vpop.f32.mrb[0].mxu0
    %304 = vdwg.mxu0
    %v305 = vld [vmem:[%s3] sm:$0x1]
    %v306 = vld [vmem:[%s4] sm:$0x1]
    %v307 = vadd.f32 %v291, %v294
    %v308 = vadd.f32 %v307, %v299
    %v309 = vadd.f32 %v308, %v302
    %v310 = vrot.slane %v309, 4
    %v311 = vadd.f32 %v309, %v310
    %v312 = vrot.slane %v311, 2
    %v313 = vadd.f32 %v311, %v312
    %v314 = vrot.slane %v313, 1
    %v315 = vadd.f32 %v313, %v314
    %v316 = vrcp.pop 32.0
    %v317 = vmul.f32 %v315, %v316
    %v318 = vsub.f32 %v291, %v317
    %v319 = vsub.f32 %v294, %v317
    %v320 = vsub.f32 %v299, %v317
    %v321 = vsub.f32 %v302, %v317
    %v322 = vmul.f32 %v318, %v318
    %v323 = vmul.f32 %v319, %v319
    %v324 = vmul.f32 %v320, %v320
    %v325 = vmul.f32 %v321, %v321
    %v326 = vadd.f32 %v322, %v323
    %v327 = vadd.f32 %v326, %v324
    %v328 = vadd.f32 %v327, %v325
    %v329 = vrot.slane %v328, 4
    %v330 = vadd.f32 %v328, %v329
    %v331 = vrot.slane %v330, 2
    %v332 = vadd.f32 %v330, %v331
    %v333 = vrot.slane %v332, 1
    %v334 = vadd.f32 %v332, %v333
    %v335 = vmul.f32 %v334, %v316
    %v336 = vadd.f32 %v335, 1e-05
    %v337 = vrsqrt.pop %v336
    %v338 = vmul.f32 %v305, %v337
    %v339 = vmul.f32 %v317, %v338
    %v340 = vsub.f32 %v306, %v339
    %v342 = vlaneseq
    %v343 = vshrl.u32 %v342, 7
    %v344 = vsub.s32 0, %v343
    %v345 = vrot.slane %v338, %v344
    %v347 = vmul.f32 %v291, %v345
    %v348 = vmul.f32 %v294, %v345
    %v349 = vmul.f32 %v299, %v345
    %v350 = vmul.f32 %v302, %v345
    %v352 = vlaneseq
    %v353 = vshrl.u32 %v352, 7
    %v354 = vsub.s32 0, %v353
    %v355 = vrot.slane %v340, %v354
    %v357 = vadd.f32 %v347, %v355
    %v358 = vadd.f32 %v348, %v355
    %v359 = vadd.f32 %v349, %v355
    %v360 = vadd.f32 %v350, %v355
    %v361 = vmax.f32 %v357, 0.0
    %v362 = vmax.f32 %v358, 0.0
    %v363 = vmax.f32 %v359, 0.0
    %v364 = vmax.f32 %v360, 0.0
    %366 = vrot.lane.b32.xlu0 %v362, 8
    %v367 = vpop.permute.xlu0 %366
    %370 = vrot.lane.b32.xlu0 %v363, 16
    %v371 = vpop.permute.xlu0 %370
    %374 = vrot.lane.b32.xlu0 %v364, 24
    %v375 = vpop.permute.xlu0 %374
    %v377 = vsel %vm171, %v361, %v367
    %v378 = vsel %vm92, %v377, %v371
    %v379 = vsel %vm96, %v378, %v375
    %v380 = vpack.c.bf16 %v379, %v379
    %v381 = vld [vmem:[#allocation7] sm:$0xf]
    %v382 = vld [vmem:[#allocation7 + $0x4] sm:$0xf]
    %v383 = vld [vmem:[#allocation7 + $0x8] sm:$0xf]
    %v384 = vld [vmem:[#allocation7 + $0xc] sm:$0xf]
    %v389 = vunpack.c.l.b16 %v381
    %v390 = vunpack.c.l.b16 %v382
    %v391 = vunpack.c.l.b16 %v383
    %v392 = vunpack.c.l.b16 %v384
    %v393 = vpack.c.b16 %v390, %v389
    %v394 = vpack.c.b16 %v392, %v391
    %v398 = vsel %vm100, %v380, 0
    %400 = vmatprep.subr.bf16.mxu0 0
    %401 = vmatpush1.bf16.msra.mxu0 %v393
    %402 = vmatprep.subr.bf16.mxu0 0
    %403 = vmatpush1.bf16.msra.mxu0 %v394
    %404 = vmatprep.subr.bf16.mxu0 0
    %405 = vmatpush1.bf16.msra.mxu0 0
    %406 = vmatprep.subr.bf16.mxu0 0
    %407 = vmatpush1.bf16.msra.mxu0 0
    %408 = vmatprep.subr.bf16.mxu0 0
    %409 = vmatpush1.bf16.msra.mxu0 0
    %410 = vmatprep.subr.bf16.mxu0 0
    %411 = vmatpush1.bf16.msra.mxu0 0
    %412 = vmatprep.subr.bf16.mxu0 0
    %413 = vmatpush1.bf16.msra.mxu0 0
    %414 = vmatprep.subr.bf16.mxu0 0
    %415 = vmatpush1.bf16.msra.mxu0 0
    %416 = vmatprep.subr.bf16.mxu0 0
    %417 = vmatpush1.bf16.msra.mxu0 0
    %418 = vmatprep.subr.bf16.mxu0 0
    %419 = vmatpush1.bf16.msra.mxu0 0
    %420 = vmatprep.subr.bf16.mxu0 0
    %421 = vmatpush1.bf16.msra.mxu0 0
    %422 = vmatprep.subr.bf16.mxu0 0
    %423 = vmatpush1.bf16.msra.mxu0 0
    %424 = vmatprep.subr.bf16.mxu0 0
    %425 = vmatpush1.bf16.msra.mxu0 0
    %426 = vmatprep.subr.bf16.mxu0 0
    %427 = vmatpush1.bf16.msra.mxu0 0
    %428 = vmatprep.subr.bf16.mxu0 0
    %429 = vmatpush1.bf16.msra.mxu0 0
    %430 = vmatprep.subr.bf16.mxu0 0
    %431 = vmatpush1.bf16.msra.mxu0 0
    %432 = vmatprep.mubr.bf16.mxu0 0
    %433 = vmatmul.mubr.bf16.gmra.mrb[0].mxu0 %v398
    %v434 = vpop.f32.mrb[0].mxu0
    %v435 = vadd.f32 0.0, %v434
    %v436 = vpop.f32.mrb[0].mxu0
    %v437 = vpop.f32.mrb[0].mxu0
    %v438 = vpop.f32.mrb[0].mxu0
    %439 = vdwg.mxu0
    %v440 = vld [vmem:[%s5] sm:$0x1]
    %v441 = vld [vmem:[%s6] sm:$0x1]
    %v442 = vrot.slane %v435, 4
    %v443 = vadd.f32 %v435, %v442
    %v444 = vrot.slane %v443, 2
    %v445 = vadd.f32 %v443, %v444
    %v446 = vrot.slane %v445, 1
    %v447 = vadd.f32 %v445, %v446
    %v448 = vrcp.pop 8.0
    %v449 = vmul.f32 %v447, %v448
    %v450 = vsub.f32 %v435, %v449
    %v451 = vmul.f32 %v450, %v450
    %v452 = vrot.slane %v451, 4
    %v453 = vadd.f32 %v451, %v452
    %v454 = vrot.slane %v453, 2
    %v455 = vadd.f32 %v453, %v454
    %v456 = vrot.slane %v455, 1
    %v457 = vadd.f32 %v455, %v456
    %v458 = vmul.f32 %v457, %v448
    %v459 = vadd.f32 %v458, 1e-05
    %v460 = vrsqrt.pop %v459
    %v461 = vmul.f32 %v440, %v460
    %v462 = vmul.f32 %v449, %v461
    %v463 = vsub.f32 %v441, %v462
    %v465 = vlaneseq
    %v466 = vshrl.u32 %v465, 7
    %v467 = vsub.s32 0, %v466
    %v468 = vrot.slane %v461, %v467
    %v470 = vmul.f32 %v435, %v468
    %v472 = vlaneseq
    %v473 = vshrl.u32 %v472, 7
    %v474 = vsub.s32 0, %v473
    %v475 = vrot.slane %v463, %v474
    %v477 = vadd.f32 %v470, %v475
    %v478 = vmax.f32 %v477, 0.0
    %v479 = vld [vmem:[#allocation2] sm:$0xff]
    %v480 = vld [vmem:[#allocation2 + $0x8] sm:$0xff]
    %v481 = vld [vmem:[#allocation2 + $0x10] sm:$0xff]
    %v482 = vld [vmem:[#allocation2 + $0x18] sm:$0xff]
    %v483 = vld [vmem:[#allocation2 + $0x20] sm:$0xff]
    %v484 = vld [vmem:[#allocation2 + $0x28] sm:$0xff]
    %v485 = vld [vmem:[#allocation2 + $0x30] sm:$0xff]
    %v486 = vld [vmem:[#allocation2 + $0x38] sm:$0xff]
    %v487 = vld [vmem:[#allocation2 + $0x40] sm:$0xff]
    %v488 = vld [vmem:[#allocation2 + $0x48] sm:$0xff]
    %v489 = vld [vmem:[#allocation2 + $0x50] sm:$0xff]
    %v490 = vld [vmem:[#allocation2 + $0x58] sm:$0xff]
    %v491 = vld [vmem:[#allocation2 + $0x60] sm:$0xff]
    %v492 = vld [vmem:[#allocation2 + $0x68] sm:$0xff]
    %v493 = vld [vmem:[#allocation2 + $0x70] sm:$0xff]
    %v494 = vld [vmem:[#allocation2 + $0x78] sm:$0xff]
    %v495 = vadd.f32 %v479, %v478
    %v496 = vadd.f32 %v480, %v478
    %v497 = vadd.f32 %v481, %v478
    %v498 = vadd.f32 %v482, %v478
    %v499 = vadd.f32 %v483, %v478
    %v500 = vadd.f32 %v484, %v478
    %v501 = vadd.f32 %v485, %v478
    %v502 = vadd.f32 %v486, %v478
    %v503 = vadd.f32 %v487, %v478
    %v504 = vadd.f32 %v488, %v478
    %v505 = vadd.f32 %v489, %v478
    %v506 = vadd.f32 %v490, %v478
    %v507 = vadd.f32 %v491, %v478
    %v508 = vadd.f32 %v492, %v478
    %v509 = vadd.f32 %v493, %v478
    %v510 = vadd.f32 %v494, %v478
    %511 = vst [vmem:[#allocation8] sm:$0xff] %v495
    %512 = vst [vmem:[#allocation8 + $0x8] sm:$0xff] %v496
    %513 = vst [vmem:[#allocation8 + $0x10] sm:$0xff] %v497
    %514 = vst [vmem:[#allocation8 + $0x18] sm:$0xff] %v498
    %515 = vst [vmem:[#allocation8 + $0x20] sm:$0xff] %v499
    %516 = vst [vmem:[#allocation8 + $0x28] sm:$0xff] %v500
    %517 = vst [vmem:[#allocation8 + $0x30] sm:$0xff] %v501
    %518 = vst [vmem:[#allocation8 + $0x38] sm:$0xff] %v502
    %519 = vst [vmem:[#allocation8 + $0x40] sm:$0xff] %v503
    %520 = vst [vmem:[#allocation8 + $0x48] sm:$0xff] %v504
    %521 = vst [vmem:[#allocation8 + $0x50] sm:$0xff] %v505
    %522 = vst [vmem:[#allocation8 + $0x58] sm:$0xff] %v506
    %523 = vst [vmem:[#allocation8 + $0x60] sm:$0xff] %v507
    %524 = vst [vmem:[#allocation8 + $0x68] sm:$0xff] %v508
    %525 = vst [vmem:[#allocation8 + $0x70] sm:$0xff] %v509
    %526 = vst [vmem:[#allocation8 + $0x78] sm:$0xff] %v510
    // Predicated region
    $region42: #{tpu_custom_call.1} parent=1 // pred_check
      _
    $region43: #{tpu_custom_call.1} parent=1 // pred_check_branch
      %528 = sbr.rel (0) target = $region45
    $region44: #{tpu_custom_call.1} parent=1 // pred_region
      %s530 = ssub.s32 2048, 2048
      %531 = vsyncadd [#allocation4], %s530
      %s532 = sshll.u32 [#allocation8], 4
      %s533 = int_to_ptr.vmem [resolvable:$true] %s532
      %538 = dma.vmem_to_hbm [thread:$0]  %s533, 2048, %s7, [#allocation4], 128, 128, 8
    $region45: #{tpu_custom_call.1} parent=1 // pred_fallthru
      _
    // Predicated region
    $region46: #{tpu_custom_call.1} parent=1 // pred_check
      _
    $region47: #{tpu_custom_call.1} parent=1 // pred_check_branch
      %540 = sbr.rel (0) target = $region49
    $region48: #{tpu_custom_call.1} parent=1 // pred_region
      %541 = dma.done [#allocation4], 2048
    $region49: #{tpu_custom_call.1} parent=1 // pred_fallthru
      _
    %542 = vsyncpa [#allocation3], 1
    %543 = vsyncpa [#allocation6], 1
    %544 = vsyncpa [#allocation4], 1

</llo_original>
